<compile_context>
chip_gen: v5e
topology: v5e:2x2
jax: 0.10.0
libtpu: 0.0.40
codegen_flags: <defaults>
</compile_context>

<pallas_src>
import jax
import jax.numpy as jnp
from jax.experimental import pallas as pl
from jax.experimental.pallas import tpu as pltpu


def _round_up(x: int, m: int) -> int:
    return ((x + m - 1) // m) * m


def _rand_kernel(seed_ref, o_ref):
    """Fill o_ref (TILE_ROWS, LANE) with uniform [0,1) f32 values."""
    tile_rows, lane = o_ref.shape
    pid = pl.program_id(0).astype(jnp.uint32)

    # Unique global element index for every slot of this tile.
    base = pid * jnp.uint32(tile_rows * lane)
    row = jax.lax.broadcasted_iota(jnp.uint32, (tile_rows, lane), 0)
    col = jax.lax.broadcasted_iota(jnp.uint32, (tile_rows, lane), 1)
    idx = base + row * jnp.uint32(lane) + col

    # Mix seed in, then lowbias32 integer hash (good avalanche, VPU-only ops).
    seed = seed_ref[0].astype(jnp.uint32)
    h = idx + seed * jnp.uint32(0x9E3779B9)
    h = h ^ (h >> 16)
    h = h * jnp.uint32(0x7FEB352D)
    h = h ^ (h >> 15)
    h = h * jnp.uint32(0x846CA68B)
    h = h ^ (h >> 16)

    # Top 24 bits -> exactly representable in f32 -> uniform [0, 1).
    top24 = (h >> 8).astype(jnp.int32)  # < 2**24, fits signed int32
    o_ref[...] = top24.astype(jnp.float32) * jnp.float32(1.0 / (1 << 24))


def random_forward(x: jax.Array, seed: int = 0) -> jax.Array:
    """Mirror of Random.forward: returns uniform scores (seq_len, batch_size, 1)."""
    seq_len, batch_size, _ = x.shape
    n = seq_len * batch_size

    # Lane-dense flattened slab: (rows_pad, LANE), LANE multiple of 128.
    lane = 1024 if n >= 1024 else 128
    rows = pl.cdiv(n, lane)
    tile_rows = 512 if rows >= 512 else _round_up(rows, 8)
    rows_pad = _round_up(rows, tile_rows)
    grid = rows_pad // tile_rows

    seed_arr = jnp.asarray([seed], dtype=jnp.int32)

    slab = pl.pallas_call(
        _rand_kernel,
        out_shape=jax.ShapeDtypeStruct((rows_pad, lane), jnp.float32),
        grid_spec=pltpu.PrefetchScalarGridSpec(
            num_scalar_prefetch=1,
            grid=(grid,),
            in_specs=[],
            out_specs=pl.BlockSpec((tile_rows, lane), lambda i, seed: (i, 0)),
        ),
        compiler_params=pltpu.CompilerParams(
            dimension_semantics=("parallel",),
        ),
    )(seed_arr)

    # Free metadata reshape / slice back to the module's output layout.
    return slab.reshape(-1)[:n].reshape(seq_len, batch_size, 1)


if __name__ == "__main__":
    key = jax.random.PRNGKey(0)

    # Small shape consistent with the module: (seq_len, batch_size, input_size).
    seq_len, batch_size, input_size = 8, 2, 32
    x = jax.random.normal(key, (seq_len, batch_size, input_size), dtype=jnp.float32)

    probs = random_forward(x, seed=0)
    probs = jax.block_until_ready(probs)

    assert probs.shape == (seq_len, batch_size, 1), probs.shape
    assert probs.dtype == jnp.float32, probs.dtype
    assert bool(jnp.all(probs >= 0.0)) and bool(jnp.all(probs < 1.0))
    # Values should actually vary (not a constant tile).
    assert float(jnp.std(probs)) > 0.0

    # Larger shape to exercise the multi-tile, padded, pipelined grid path.
    x2 = jnp.zeros((1024, 513, 4), dtype=jnp.float32)
    probs2 = jax.block_until_ready(random_forward(x2, seed=7))
    assert probs2.shape == (1024, 513, 1), probs2.shape
    assert bool(jnp.all(probs2 >= 0.0)) and bool(jnp.all(probs2 < 1.0))
    m2 = float(jnp.mean(probs2))
    assert 0.45 < m2 < 0.55, m2  # uniform mean sanity check

    print("KERNEL_OK")
</pallas_src>

<mosaic_0001>
module attributes {stable_mosaic.version = 11 : i64} {
  func.func @_rand_kernel(%arg0: i32, %arg1: memref<1xi32, #tpu.memory_space<smem>>, %arg2: memref<8x128xf32, #tpu.memory_space<vmem>>) attributes {dimension_semantics = [#tpu.dimension_semantics<parallel>], iteration_bounds = array<i64: 1>, scalar_prefetch = 1 : i64, scratch_operands = 0 : i64, tpu.core_type = #tpu.core_type<tc>, window_params = [{transform_indices = @transform_0, window_bounds = array<i64: 8, 128>}]} {
    %c1024_i32 = arith.constant 1024 : i32
    %0 = arith.muli %arg0, %c1024_i32 : i32
    %1 = tpu.iota {dimensions = array<i32: 0>} : vector<8x128xi32>
    %2 = tpu.iota {dimensions = array<i32: 1>} : vector<8x128xi32>
    %c128_i32 = arith.constant 128 : i32
    %3 = vector.broadcast %c128_i32 : i32 to vector<8x128xi32>
    %4 = arith.muli %1, %3 : vector<8x128xi32>
    %5 = vector.broadcast %0 : i32 to vector<8x128xi32>
    %6 = arith.addi %5, %4 : vector<8x128xi32>
    %7 = arith.addi %6, %2 : vector<8x128xi32>
    %c0 = arith.constant 0 : index
    %8 = memref.load %arg1[%c0] : memref<1xi32, #tpu.memory_space<smem>>
    %c-1640531527_i32 = arith.constant -1640531527 : i32
    %9 = arith.muli %8, %c-1640531527_i32 : i32
    %10 = vector.broadcast %9 : i32 to vector<8x128xi32>
    %11 = arith.addi %7, %10 : vector<8x128xi32>
    %c16_i32 = arith.constant 16 : i32
    %12 = vector.broadcast %c16_i32 : i32 to vector<8x128xi32>
    %13 = arith.shrui %11, %12 : vector<8x128xi32>
    %14 = arith.xori %11, %13 : vector<8x128xi32>
    %c2146121005_i32 = arith.constant 2146121005 : i32
    %15 = vector.broadcast %c2146121005_i32 : i32 to vector<8x128xi32>
    %16 = arith.muli %14, %15 : vector<8x128xi32>
    %c15_i32 = arith.constant 15 : i32
    %17 = vector.broadcast %c15_i32 : i32 to vector<8x128xi32>
    %18 = arith.shrui %16, %17 : vector<8x128xi32>
    %19 = arith.xori %16, %18 : vector<8x128xi32>
    %c-2073254261_i32 = arith.constant -2073254261 : i32
    %20 = vector.broadcast %c-2073254261_i32 : i32 to vector<8x128xi32>
    %21 = arith.muli %19, %20 : vector<8x128xi32>
    %c16_i32_0 = arith.constant 16 : i32
    %22 = vector.broadcast %c16_i32_0 : i32 to vector<8x128xi32>
    %23 = arith.shrui %21, %22 : vector<8x128xi32>
    %24 = arith.xori %21, %23 : vector<8x128xi32>
    %c8_i32 = arith.constant 8 : i32
    %25 = vector.broadcast %c8_i32 : i32 to vector<8x128xi32>
    %26 = arith.shrui %24, %25 : vector<8x128xi32>
    %27 = arith.sitofp %26 : vector<8x128xi32> to vector<8x128xf32>
    %cst = arith.constant 5.96046448E-8 : f32
    %28 = vector.broadcast %cst : f32 to vector<8x128xf32>
    %29 = arith.mulf %27, %28 : vector<8x128xf32>
    %c0_1 = arith.constant 0 : index
    %c0_2 = arith.constant 0 : index
    %30 = vector.load %arg2[%c0_1, %c0_2] : memref<8x128xf32, #tpu.memory_space<vmem>>, vector<8x128xf32>
    tpu.vector_store %arg2[%c0_1, %c0_2], %29 {strides = array<i32>} : memref<8x128xf32, #tpu.memory_space<vmem>>, vector<8x128xf32>,
    return
  }
  func.func @transform_0(%arg0: i32, %arg1: memref<1xi32, #tpu.memory_space<smem>>) -> (i32, i32) {
    %c0_i32 = arith.constant 0 : i32
    %c0_i32_0 = arith.constant 0 : i32
    return %arg0, %c0_i32 : i32, i32
  }
}

</mosaic_0001>

<llo_original>
// kernel: tpu_custom_call.1
$region0: #{tpu_custom_call.1}
  #allocation0 [shape = 'u32[]', space=smem, size = 0x4, offset = 0x4, fixed_abs, tag = 'smem constant byte address 0x4 - core index']
  #allocation1 [shape = 'u32[72,128]{1,0:T(1,128)}', space=vmem, size = 0x9000, scoped, tag = 'internal scratch']
  #allocation2 [shape = 's32[1]{0}', space=sflag, size = 0x4, scoped, tag = 'scoped memory for tpu_custom_call.1']
  #allocation3 [shape = 's32[1]{0:T(128)S(6)}', space=smem, size = 0x200, scoped, tag = 'prefetched SMEM operand 0']
  %s0 = inlined_call_operand.<no memory space> [shape: s32[1], index: 0, kind: input, shape index: {}]
  %s1 = inlined_call_operand.hbm [shape: f32[8,128], index: 1, kind: output, shape index: {}]
  %s2 = sld [smem:[#allocation0]]
  $region10: #{tpu_custom_call.1} parent=0
    _
  %s4 = ssub.s32 1, %s2
  %s5 = scalar_select 0, %s4, %s2
  %6 = sst [smem:[#allocation3]] %s0
  $region1: #{tpu_custom_call.1} parent=0
    #allocation4 [shape = 'u8[4096]{0}', space=vmem, size = 0x1000, scoped, tag = 'output window, operand 0, single buffered']
    #allocation5 [shape = 's32[1]{0}', space=sflag, size = 0x4, scoped, tag = 'scoped memory for tpu_custom_call.1']
    %7 = vsyncpa [#allocation5], 0
    %s8 = smul.u32 0, 1024
    %v9 = vlaneseq
    %v10 = vshrl.u32 %v9, 7
    %v11 = vlaneseq
    %v12 = vand.u32 %v11, 127
    %v13 = vmul.u32 %v10, 128
    %v14 = vstv %s8
    %v15 = vadd.s32 %v14, %v13
    %v16 = vadd.s32 %v15, %v12
    %s17 = sld [smem:[#allocation3]]
    %s18 = smul.u32 %s17, 2654435769
    %v19 = vstv %s18
    %v20 = vadd.s32 %v16, %v19
    %v21 = vshrl.u32 %v20, 16
    %v22 = vxor.u32 %v20, %v21
    %v23 = vmul.u32 %v22, 2146121005
    %v24 = vshrl.u32 %v23, 15
    %v25 = vxor.u32 %v23, %v24
    %v26 = vmul.u32 %v25, 2221713035
    %v27 = vshrl.u32 %v26, 16
    %v28 = vxor.u32 %v26, %v27
    %v29 = vshrl.u32 %v28, 8
    %v30 = vcvt.s32.f32 %v29
    %v31 = vmul.f32 %v30, 5.9604645e-08
    %32 = vst [vmem:[#allocation4] sm:$0xff] %v31
    // Predicated region
    $region2: #{tpu_custom_call.1} parent=1 // pred_check
      _
    $region3: #{tpu_custom_call.1} parent=1 // pred_check_branch
      %34 = sbr.rel (0) target = $region5
    $region4: #{tpu_custom_call.1} parent=1 // pred_region
      %36 = vsyncadd [#allocation5], 0
      %s38 = sshll.u32 [#allocation4], 4
      %s39 = int_to_ptr.vmem [resolvable:$true] %s38
      %s40 = sshll.u32 %s1, 4
      %s41 = int_to_ptr.hbm [resolvable:$true] %s40
      %43 = dma.vmem_to_hbm [thread:$0]  %s39, 128, %s41, [#allocation5]
    $region5: #{tpu_custom_call.1} parent=1 // pred_fallthru
      _
    // Predicated region
    $region6: #{tpu_custom_call.1} parent=1 // pred_check
      _
    $region7: #{tpu_custom_call.1} parent=1 // pred_check_branch
      %45 = sbr.rel (0) target = $region9
    $region8: #{tpu_custom_call.1} parent=1 // pred_region
      %47 = dma.done [#allocation5], 128
    $region9: #{tpu_custom_call.1} parent=1 // pred_fallthru
      _
    %48 = vsyncpa [#allocation5], 1

</llo_original>
